<compile_context>
chip_gen: v5e
topology: v5e:2x2
jax: 0.10.0
libtpu: 0.0.40
codegen_flags: <defaults>
</compile_context>

<pallas_src>
import jax
import jax.numpy as jnp
from jax import lax
from jax.experimental import pallas as pl
from jax.experimental.pallas import tpu as pltpu

BN_EPS = 1e-5
LANE = 128           # lane width (last dim granularity)
SUBLANE_BF16 = 16    # bf16 sublane packing (second-to-last dim granularity)


def _pad_up(n, m):
    return ((n + m - 1) // m) * m


def _full_block(shape):
    """BlockSpec covering the whole (already padded) array in VMEM."""
    z = (0,) * len(shape)
    return pl.BlockSpec(shape, lambda *_: z)


# ---------------------------------------------------------------------------
# Fused kernel: all Residual blocks + final Linear in one pallas_call
# ---------------------------------------------------------------------------
def _make_generator_kernel(n_res, e_pad, gpads, b_real, b_pad):
    """Build the fused Generator kernel for a static layer configuration."""

    def kernel(*refs):
        # refs = [x, (w,b,gamma,beta) * n_res, w_final, b_final, out, slab_scratch]
        x_ref = refs[0]
        res_refs = refs[1:1 + 4 * n_res]
        wf_ref = refs[1 + 4 * n_res]
        bf_ref = refs[2 + 4 * n_res]
        out_ref = refs[3 + 4 * n_res]
        slab_ref = refs[4 + 4 * n_res]

        # Mask of real (non-padded) batch rows so BN stats use exactly b_real rows.
        row_mask = (lax.broadcasted_iota(jnp.int32, (b_pad, 1), 0)
                    < b_real).astype(jnp.float32)
        inv_n = jnp.float32(1.0 / b_real)

        # Seed the slab with the (padded, bf16) latent: slab = [x | out_1 | ...]
        slab_ref[:, 0:e_pad] = x_ref[...]

        off = e_pad
        for k in range(n_res):
            w_ref, b_ref, g_ref, be_ref = res_refs[4 * k: 4 * k + 4]

            # Linear on the MXU: bf16 inputs straight from the slab, f32 accumulation.
            xin = slab_ref[:, 0:off]                       # lane-aligned bf16 prefix
            h = jnp.dot(xin, w_ref[...],
                        preferred_element_type=jnp.float32) + b_ref[...]

            # BatchNorm1d (training mode), one-pass masked statistics in f32.
            hm = h * row_mask
            mean = jnp.sum(hm, axis=0, keepdims=True) * inv_n
            ex2 = jnp.sum(hm * h, axis=0, keepdims=True) * inv_n
            var = jnp.maximum(ex2 - mean * mean, 0.0)
            y = (h - mean) * lax.rsqrt(var + BN_EPS) * g_ref[...] + be_ref[...]

            # ReLU + "concat": write the block output into its slab segment (bf16).
            gpad = gpads[k]
            slab_ref[:, off:off + gpad] = jnp.maximum(y, 0.0).astype(jnp.bfloat16)
            off += gpad

        # Final Linear over the full slab.
        out_ref[...] = (
            jnp.dot(slab_ref[...], wf_ref[...],
                    preferred_element_type=jnp.float32) + bf_ref[...]
        )

    return kernel


# ---------------------------------------------------------------------------
# Wrapper
# ---------------------------------------------------------------------------
def generator_forward(packed, x):
    """x: (B, embedding_dim) float32  ->  (B, data_dim) float32."""
    cfg = packed["cfg"]
    B, E = x.shape
    assert E == cfg["embedding_dim"]

    e_pad = cfg["e_pad"]
    gpads = cfg["gpads"]
    d_pad = cfg["d_pad"]
    total_pad = e_pad + sum(gpads)
    b_pad = max(_pad_up(B, SUBLANE_BF16), SUBLANE_BF16)

    # Zero-pad the latent input to (b_pad, e_pad), already bf16 (halves input DMA).
    x_pad = (jnp.zeros((b_pad, e_pad), jnp.bfloat16)
             .at[:B, :E].set(x.astype(jnp.bfloat16)))

    operands = [x_pad]
    for p in packed["residuals"]:
        operands += [p["w"], p["b"], p["gamma"], p["beta"]]
    operands += [packed["final"]["w"], packed["final"]["b"]]

    kernel = _make_generator_kernel(
        n_res=len(packed["residuals"]),
        e_pad=e_pad,
        gpads=tuple(gpads),
        b_real=B,
        b_pad=b_pad,
    )

    # Conservative VMEM budget: operands + output (double buffered) + slab scratch.
    est = (sum(int(op.size) * op.dtype.itemsize for op in operands) * 2
           + b_pad * d_pad * 4 * 2
           + b_pad * total_pad * 2)
    vmem_limit = int(min(60 << 20, max(16 << 20, 2 * est)))

    out_pad = pl.pallas_call(
        kernel,
        out_shape=jax.ShapeDtypeStruct((b_pad, d_pad), jnp.float32),
        in_specs=[_full_block(op.shape) for op in operands],
        out_specs=_full_block((b_pad, d_pad)),
        scratch_shapes=[pltpu.VMEM((b_pad, total_pad), jnp.bfloat16)],
        compiler_params=pltpu.CompilerParams(vmem_limit_bytes=vmem_limit),
    )(*operands)

    return out_pad[:B, :cfg["data_dim"]]


# ---------------------------------------------------------------------------
# Parameter construction & packing
# ---------------------------------------------------------------------------
def init_generator_params(key, embedding_dim, gen_dims, data_dim):
    """Logical (unpadded, f32) parameters.  Weight input rows follow the slab
    layout [x, out_1, ..., out_{k-1}]."""
    params = {"residuals": []}
    dim = embedding_dim
    for item in gen_dims:
        key, kw, kb = jax.random.split(key, 3)
        bound = 1.0 / float(dim) ** 0.5
        params["residuals"].append({
            "w": jax.random.uniform(kw, (dim, item), jnp.float32, -bound, bound),
            "b": jax.random.uniform(kb, (1, item), jnp.float32, -bound, bound),
            "gamma": jnp.ones((1, item), jnp.float32),
            "beta": jnp.zeros((1, item), jnp.float32),
        })
        dim += item
    key, kw, kb = jax.random.split(key, 3)
    bound = 1.0 / float(dim) ** 0.5
    params["final"] = {
        "w": jax.random.uniform(kw, (dim, data_dim), jnp.float32, -bound, bound),
        "b": jax.random.uniform(kb, (1, data_dim), jnp.float32, -bound, bound),
    }
    return params


def pack_generator_params(params, embedding_dim, gen_dims, data_dim):
    """Pad every segment to a multiple of 128 lanes, scatter weight rows into the
    padded slab layout, and cast weights to bf16 for the MXU."""
    e_pad = _pad_up(embedding_dim, LANE)
    gpads = [_pad_up(g, LANE) for g in gen_dims]
    d_pad = _pad_up(data_dim, LANE)
    seg_widths = [embedding_dim] + list(gen_dims)
    seg_pads = [e_pad] + gpads

    def scatter_rows(w, n_segs, out_cols, out_cols_pad):
        prefix_pad = sum(seg_pads[:n_segs])
        w_pad = jnp.zeros((prefix_pad, out_cols_pad), jnp.float32)
        src = dst = 0
        for s in range(n_segs):
            width = seg_widths[s]
            w_pad = w_pad.at[dst:dst + width, :out_cols].set(w[src:src + width, :])
            src += width
            dst += seg_pads[s]
        return w_pad.astype(jnp.bfloat16)

    def pad_vec(v, cols, cols_pad):
        return jnp.zeros((1, cols_pad), jnp.float32).at[:, :cols].set(v)

    packed = {
        "residuals": [],
        "cfg": {"embedding_dim": embedding_dim, "data_dim": data_dim,
                "e_pad": e_pad, "gpads": gpads, "d_pad": d_pad},
    }
    for k, p in enumerate(params["residuals"]):
        g, gp = gen_dims[k], gpads[k]
        packed["residuals"].append({
            "w": scatter_rows(p["w"], k + 1, g, gp),
            "b": pad_vec(p["b"], g, gp),
            "gamma": pad_vec(p["gamma"], g, gp),
            "beta": pad_vec(p["beta"], g, gp),
        })
    packed["final"] = {
        "w": scatter_rows(params["final"]["w"], len(gen_dims) + 1, data_dim, d_pad),
        "b": pad_vec(params["final"]["b"], data_dim, d_pad),
    }
    return packed


# ---------------------------------------------------------------------------
# Pure-JAX reference (f32) for validation
# ---------------------------------------------------------------------------
def generator_reference(params, x):
    slab = x
    for p in params["residuals"]:
        h = slab @ p["w"] + p["b"]
        mean = jnp.mean(h, axis=0, keepdims=True)
        var = jnp.mean((h - mean) ** 2, axis=0, keepdims=True)
        y = (h - mean) * lax.rsqrt(var + BN_EPS) * p["gamma"] + p["beta"]
        slab = jnp.concatenate([slab, jnp.maximum(y, 0.0)], axis=1)
    return slab @ params["final"]["w"] + params["final"]["b"]


# ---------------------------------------------------------------------------
if __name__ == "__main__":
    # Small shapes consistent with the module (spec default embedding_dim=128).
    # batch=6 / gen_dims=(64, 64) / data_dim=48 deliberately exercise the
    # row-mask and lane-padding paths.
    embedding_dim = 128
    gen_dims = (64, 64)
    data_dim = 48
    batch = 6

    key = jax.random.PRNGKey(0)
    key, kx = jax.random.split(key)
    x = jax.random.normal(kx, (batch, embedding_dim), dtype=jnp.float32)

    params = init_generator_params(key, embedding_dim, gen_dims, data_dim)
    packed = pack_generator_params(params, embedding_dim, gen_dims, data_dim)

    out = generator_forward(packed, x)
    out = jax.block_until_ready(out)

    assert out.shape == (batch, data_dim), out.shape
    assert bool(jnp.all(jnp.isfinite(out)))

    ref = generator_reference(params, x)
    max_err = float(jnp.max(jnp.abs(out - ref)))
    assert max_err < 5e-2, f"max abs err {max_err}"  # bf16 MXU tolerance

    print("KERNEL_OK")
</pallas_src>

<mosaic_0001>
module attributes {stable_mosaic.version = 11 : i64} {
  func.func @kernel(%arg0: memref<16x128xbf16, #tpu.memory_space<vmem>>, %arg1: memref<128x128xbf16, #tpu.memory_space<vmem>>, %arg2: memref<1x128xf32, #tpu.memory_space<vmem>>, %arg3: memref<1x128xf32, #tpu.memory_space<vmem>>, %arg4: memref<1x128xf32, #tpu.memory_space<vmem>>, %arg5: memref<256x128xbf16, #tpu.memory_space<vmem>>, %arg6: memref<1x128xf32, #tpu.memory_space<vmem>>, %arg7: memref<1x128xf32, #tpu.memory_space<vmem>>, %arg8: memref<1x128xf32, #tpu.memory_space<vmem>>, %arg9: memref<384x128xbf16, #tpu.memory_space<vmem>>, %arg10: memref<1x128xf32, #tpu.memory_space<vmem>>, %arg11: memref<16x128xf32, #tpu.memory_space<vmem>>, %arg12: memref<16x384xbf16, #tpu.memory_space<vmem>>) attributes {dimension_semantics = [], scalar_prefetch = 0 : i64, scratch_operands = 1 : i64, tpu.core_type = #tpu.core_type<tc>} {
    %0 = tpu.iota {dimensions = array<i32: 0>} : vector<16x1xi32>
    %c6_i32 = arith.constant 6 : i32
    %1 = vector.broadcast %c6_i32 : i32 to vector<16x1xi32>
    %2 = arith.cmpi slt, %0, %1 : vector<16x1xi32>
    %3 = arith.extui %2 : vector<16x1xi1> to vector<16x1xi32>
    %4 = arith.sitofp %3 : vector<16x1xi32> to vector<16x1xf32>
    %c0 = arith.constant 0 : index
    %c0_0 = arith.constant 0 : index
    %5 = vector.load %arg0[%c0, %c0_0] : memref<16x128xbf16, #tpu.memory_space<vmem>>, vector<16x128xbf16>
    %c0_1 = arith.constant 0 : index
    %c0_2 = arith.constant 0 : index
    %6 = vector.load %arg12[%c0_1, %c0_2] : memref<16x384xbf16, #tpu.memory_space<vmem>>, vector<16x128xbf16>
    tpu.vector_store %arg12[%c0_1, %c0_2], %5 {strides = array<i32>} : memref<16x384xbf16, #tpu.memory_space<vmem>>, vector<16x128xbf16>,
    %c0_3 = arith.constant 0 : index
    %c0_4 = arith.constant 0 : index
    %7 = vector.load %arg12[%c0_3, %c0_4] : memref<16x384xbf16, #tpu.memory_space<vmem>>, vector<16x128xbf16>
    %c0_5 = arith.constant 0 : index
    %c0_6 = arith.constant 0 : index
    %8 = vector.load %arg1[%c0_5, %c0_6] : memref<128x128xbf16, #tpu.memory_space<vmem>>, vector<128x128xbf16>
    %cst = arith.constant dense<0.000000e+00> : vector<16x128xf32>
    %9 = tpu.matmul %7, %8, %cst {dimension_numbers = #tpu.dot_dimension_numbers<[1], [0], [0], [1], [0, 0, 1, 1], [], []>} : vector<16x128xbf16>, vector<128x128xbf16>, vector<16x128xf32> -> vector<16x128xf32>
    %c0_7 = arith.constant 0 : index
    %c0_8 = arith.constant 0 : index
    %10 = vector.load %arg2[%c0_7, %c0_8] : memref<1x128xf32, #tpu.memory_space<vmem>>, vector<1x128xf32>
    %11 = vector.broadcast %10 : vector<1x128xf32> to vector<16x128xf32>
    %12 = arith.addf %9, %11 : vector<16x128xf32>
    %13 = vector.broadcast %4 : vector<16x1xf32> to vector<16x128xf32>
    %14 = arith.mulf %12, %13 : vector<16x128xf32>
    %cst_9 = arith.constant dense<0.000000e+00> : vector<128xf32>
    %15 = vector.multi_reduction <add>, %14, %cst_9 [0] : vector<16x128xf32> to vector<128xf32>
    %16 = vector.shape_cast %15 : vector<128xf32> to vector<1x128xf32>
    %cst_10 = arith.constant 0.166666672 : f32
    %17 = vector.broadcast %cst_10 : f32 to vector<1x128xf32>
    %18 = arith.mulf %16, %17 : vector<1x128xf32>
    %19 = arith.mulf %14, %12 : vector<16x128xf32>
    %cst_11 = arith.constant dense<0.000000e+00> : vector<128xf32>
    %20 = vector.multi_reduction <add>, %19, %cst_11 [0] : vector<16x128xf32> to vector<128xf32>
    %21 = vector.shape_cast %20 : vector<128xf32> to vector<1x128xf32>
    %cst_12 = arith.constant 0.166666672 : f32
    %22 = vector.broadcast %cst_12 : f32 to vector<1x128xf32>
    %23 = arith.mulf %21, %22 : vector<1x128xf32>
    %24 = arith.mulf %18, %18 : vector<1x128xf32>
    %25 = arith.subf %23, %24 : vector<1x128xf32>
    %cst_13 = arith.constant 0.000000e+00 : f32
    %26 = vector.broadcast %cst_13 : f32 to vector<1x128xf32>
    %27 = arith.maximumf %25, %26 : vector<1x128xf32>
    %28 = vector.broadcast %18 : vector<1x128xf32> to vector<16x128xf32>
    %29 = arith.subf %12, %28 : vector<16x128xf32>
    %cst_14 = arith.constant 9.99999974E-6 : f32
    %30 = vector.broadcast %cst_14 : f32 to vector<1x128xf32>
    %31 = arith.addf %27, %30 : vector<1x128xf32>
    %32 = math.rsqrt %31 : vector<1x128xf32>
    %33 = vector.broadcast %32 : vector<1x128xf32> to vector<16x128xf32>
    %34 = arith.mulf %29, %33 : vector<16x128xf32>
    %c0_15 = arith.constant 0 : index
    %c0_16 = arith.constant 0 : index
    %35 = vector.load %arg3[%c0_15, %c0_16] : memref<1x128xf32, #tpu.memory_space<vmem>>, vector<1x128xf32>
    %36 = vector.broadcast %35 : vector<1x128xf32> to vector<16x128xf32>
    %37 = arith.mulf %34, %36 : vector<16x128xf32>
    %c0_17 = arith.constant 0 : index
    %c0_18 = arith.constant 0 : index
    %38 = vector.load %arg4[%c0_17, %c0_18] : memref<1x128xf32, #tpu.memory_space<vmem>>, vector<1x128xf32>
    %39 = vector.broadcast %38 : vector<1x128xf32> to vector<16x128xf32>
    %40 = arith.addf %37, %39 : vector<16x128xf32>
    %cst_19 = arith.constant 0.000000e+00 : f32
    %41 = vector.broadcast %cst_19 : f32 to vector<16x128xf32>
    %42 = arith.maximumf %40, %41 : vector<16x128xf32>
    %43 = arith.truncf %42 : vector<16x128xf32> to vector<16x128xbf16>
    %c0_20 = arith.constant 0 : index
    %c128 = arith.constant 128 : index
    %44 = vector.load %arg12[%c0_20, %c128] : memref<16x384xbf16, #tpu.memory_space<vmem>>, vector<16x128xbf16>
    tpu.vector_store %arg12[%c0_20, %c128], %43 {strides = array<i32>} : memref<16x384xbf16, #tpu.memory_space<vmem>>, vector<16x128xbf16>,
    %c0_21 = arith.constant 0 : index
    %c0_22 = arith.constant 0 : index
    %45 = vector.load %arg12[%c0_21, %c0_22] : memref<16x384xbf16, #tpu.memory_space<vmem>>, vector<16x256xbf16>
    %c0_23 = arith.constant 0 : index
    %c0_24 = arith.constant 0 : index
    %46 = vector.load %arg5[%c0_23, %c0_24] : memref<256x128xbf16, #tpu.memory_space<vmem>>, vector<256x128xbf16>
    %cst_25 = arith.constant dense<0.000000e+00> : vector<16x128xf32>
    %47 = tpu.matmul %45, %46, %cst_25 {dimension_numbers = #tpu.dot_dimension_numbers<[1], [0], [0], [1], [0, 0, 1, 1], [], []>} : vector<16x256xbf16>, vector<256x128xbf16>, vector<16x128xf32> -> vector<16x128xf32>
    %c0_26 = arith.constant 0 : index
    %c0_27 = arith.constant 0 : index
    %48 = vector.load %arg6[%c0_26, %c0_27] : memref<1x128xf32, #tpu.memory_space<vmem>>, vector<1x128xf32>
    %49 = vector.broadcast %48 : vector<1x128xf32> to vector<16x128xf32>
    %50 = arith.addf %47, %49 : vector<16x128xf32>
    %51 = vector.broadcast %4 : vector<16x1xf32> to vector<16x128xf32>
    %52 = arith.mulf %50, %51 : vector<16x128xf32>
    %cst_28 = arith.constant dense<0.000000e+00> : vector<128xf32>
    %53 = vector.multi_reduction <add>, %52, %cst_28 [0] : vector<16x128xf32> to vector<128xf32>
    %54 = vector.shape_cast %53 : vector<128xf32> to vector<1x128xf32>
    %cst_29 = arith.constant 0.166666672 : f32
    %55 = vector.broadcast %cst_29 : f32 to vector<1x128xf32>
    %56 = arith.mulf %54, %55 : vector<1x128xf32>
    %57 = arith.mulf %52, %50 : vector<16x128xf32>
    %cst_30 = arith.constant dense<0.000000e+00> : vector<128xf32>
    %58 = vector.multi_reduction <add>, %57, %cst_30 [0] : vector<16x128xf32> to vector<128xf32>
    %59 = vector.shape_cast %58 : vector<128xf32> to vector<1x128xf32>
    %cst_31 = arith.constant 0.166666672 : f32
    %60 = vector.broadcast %cst_31 : f32 to vector<1x128xf32>
    %61 = arith.mulf %59, %60 : vector<1x128xf32>
    %62 = arith.mulf %56, %56 : vector<1x128xf32>
    %63 = arith.subf %61, %62 : vector<1x128xf32>
    %cst_32 = arith.constant 0.000000e+00 : f32
    %64 = vector.broadcast %cst_32 : f32 to vector<1x128xf32>
    %65 = arith.maximumf %63, %64 : vector<1x128xf32>
    %66 = vector.broadcast %56 : vector<1x128xf32> to vector<16x128xf32>
    %67 = arith.subf %50, %66 : vector<16x128xf32>
    %cst_33 = arith.constant 9.99999974E-6 : f32
    %68 = vector.broadcast %cst_33 : f32 to vector<1x128xf32>
    %69 = arith.addf %65, %68 : vector<1x128xf32>
    %70 = math.rsqrt %69 : vector<1x128xf32>
    %71 = vector.broadcast %70 : vector<1x128xf32> to vector<16x128xf32>
    %72 = arith.mulf %67, %71 : vector<16x128xf32>
    %c0_34 = arith.constant 0 : index
    %c0_35 = arith.constant 0 : index
    %73 = vector.load %arg7[%c0_34, %c0_35] : memref<1x128xf32, #tpu.memory_space<vmem>>, vector<1x128xf32>
    %74 = vector.broadcast %73 : vector<1x128xf32> to vector<16x128xf32>
    %75 = arith.mulf %72, %74 : vector<16x128xf32>
    %c0_36 = arith.constant 0 : index
    %c0_37 = arith.constant 0 : index
    %76 = vector.load %arg8[%c0_36, %c0_37] : memref<1x128xf32, #tpu.memory_space<vmem>>, vector<1x128xf32>
    %77 = vector.broadcast %76 : vector<1x128xf32> to vector<16x128xf32>
    %78 = arith.addf %75, %77 : vector<16x128xf32>
    %cst_38 = arith.constant 0.000000e+00 : f32
    %79 = vector.broadcast %cst_38 : f32 to vector<16x128xf32>
    %80 = arith.maximumf %78, %79 : vector<16x128xf32>
    %81 = arith.truncf %80 : vector<16x128xf32> to vector<16x128xbf16>
    %c0_39 = arith.constant 0 : index
    %c256 = arith.constant 256 : index
    %82 = vector.load %arg12[%c0_39, %c256] : memref<16x384xbf16, #tpu.memory_space<vmem>>, vector<16x128xbf16>
    tpu.vector_store %arg12[%c0_39, %c256], %81 {strides = array<i32>} : memref<16x384xbf16, #tpu.memory_space<vmem>>, vector<16x128xbf16>,
    %c0_40 = arith.constant 0 : index
    %c0_41 = arith.constant 0 : index
    %83 = vector.load %arg12[%c0_40, %c0_41] : memref<16x384xbf16, #tpu.memory_space<vmem>>, vector<16x384xbf16>
    %c0_42 = arith.constant 0 : index
    %c0_43 = arith.constant 0 : index
    %84 = vector.load %arg9[%c0_42, %c0_43] : memref<384x128xbf16, #tpu.memory_space<vmem>>, vector<384x128xbf16>
    %cst_44 = arith.constant dense<0.000000e+00> : vector<16x128xf32>
    %85 = tpu.matmul %83, %84, %cst_44 {dimension_numbers = #tpu.dot_dimension_numbers<[1], [0], [0], [1], [0, 0, 1, 1], [], []>} : vector<16x384xbf16>, vector<384x128xbf16>, vector<16x128xf32> -> vector<16x128xf32>
    %c0_45 = arith.constant 0 : index
    %c0_46 = arith.constant 0 : index
    %86 = vector.load %arg10[%c0_45, %c0_46] : memref<1x128xf32, #tpu.memory_space<vmem>>, vector<1x128xf32>
    %87 = vector.broadcast %86 : vector<1x128xf32> to vector<16x128xf32>
    %88 = arith.addf %85, %87 : vector<16x128xf32>
    %c0_47 = arith.constant 0 : index
    %c0_48 = arith.constant 0 : index
    %89 = vector.load %arg11[%c0_47, %c0_48] : memref<16x128xf32, #tpu.memory_space<vmem>>, vector<16x128xf32>
    tpu.vector_store %arg11[%c0_47, %c0_48], %88 {strides = array<i32>} : memref<16x128xf32, #tpu.memory_space<vmem>>, vector<16x128xf32>,
    return
  }
}

</mosaic_0001>

<llo_original>
// kernel: tpu_custom_call.1
$region0: #{tpu_custom_call.1}
  #allocation0 [shape = 'u32[]', space=smem, size = 0x4, offset = 0x4, fixed_abs, tag = 'smem constant byte address 0x4 - core index']
  #allocation1 [shape = 'u32[72,128]{1,0:T(1,128)}', space=vmem, size = 0x9000, scoped, tag = 'internal scratch']
  #allocation2 [shape = 'bf16[16,384]{1,0:T(8,128)(2,1)}', space=vmem, size = 0x3000, scoped, tag = 'scratch operand']
  %s0 = inlined_call_operand.hbm [shape: bf16[16,128], index: 0, kind: input, shape index: {}]
  %s1 = inlined_call_operand.hbm [shape: bf16[128,128], index: 1, kind: input, shape index: {}]
  %s2 = inlined_call_operand.vmem [shape: f32[1,128], index: 2, kind: input, shape index: {}]
  %s3 = inlined_call_operand.vmem [shape: f32[1,128], index: 3, kind: input, shape index: {}]
  %s4 = inlined_call_operand.vmem [shape: f32[1,128], index: 4, kind: input, shape index: {}]
  %s5 = inlined_call_operand.hbm [shape: bf16[256,128], index: 5, kind: input, shape index: {}]
  %s6 = inlined_call_operand.vmem [shape: f32[1,128], index: 6, kind: input, shape index: {}]
  %s7 = inlined_call_operand.vmem [shape: f32[1,128], index: 7, kind: input, shape index: {}]
  %s8 = inlined_call_operand.vmem [shape: f32[1,128], index: 8, kind: input, shape index: {}]
  %s9 = inlined_call_operand.hbm [shape: bf16[384,128], index: 9, kind: input, shape index: {}]
  %s10 = inlined_call_operand.vmem [shape: f32[1,128], index: 10, kind: input, shape index: {}]
  %s11 = inlined_call_operand.hbm [shape: f32[16,128], index: 11, kind: output, shape index: {}]
  %s12 = sld [smem:[#allocation0]]
  $region70: #{tpu_custom_call.1} parent=0
    _
  %s14 = ssub.s32 1, %s12
  %s15 = scalar_select 0, %s14, %s12
  $region1: #{tpu_custom_call.1} parent=0
    #allocation3 [shape = 'u8[4096]{0}', space=vmem, size = 0x1000, scoped, tag = 'input window, operand 0, single buffered']
    #allocation4 [shape = 's32[1]{0}', space=sflag, size = 0x4, scoped, tag = 'scoped memory for tpu_custom_call.1']
    #allocation5 [shape = 's32[1]{0}', space=sflag, size = 0x4, scoped, tag = 'scoped memory for tpu_custom_call.1']
    #allocation6 [shape = 'u8[32768]{0}', space=vmem, size = 0x8000, scoped, tag = 'input window, operand 1, single buffered']
    #allocation7 [shape = 's32[1]{0}', space=sflag, size = 0x4, scoped, tag = 'scoped memory for tpu_custom_call.1']
    #allocation8 [shape = 'u8[65536]{0}', space=vmem, size = 0x10000, scoped, tag = 'input window, operand 5, single buffered']
    #allocation9 [shape = 'u8[98304]{0}', space=vmem, size = 0x18000, scoped, tag = 'input window, operand 9, single buffered']
    #allocation10 [shape = 's32[1]{0}', space=sflag, size = 0x4, scoped, tag = 'scoped memory for tpu_custom_call.1']
    #allocation11 [shape = 'u8[8192]{0}', space=vmem, size = 0x2000, scoped, tag = 'output window, operand 0, single buffered']
    %16 = vsyncpa [#allocation4], 0
    %17 = vsyncpa [#allocation7], 0
    %18 = vsyncpa [#allocation10], 0
    %19 = vsyncpa [#allocation5], 0
    // Predicated region
    $region2: #{tpu_custom_call.1} parent=1 // pred_check
      _
    $region3: #{tpu_custom_call.1} parent=1 // pred_check_branch
      %21 = sbr.rel (0) target = $region5
    $region4: #{tpu_custom_call.1} parent=1 // pred_region
      %23 = vsyncadd [#allocation4], 0
      %s24 = sshll.u32 %s0, 4
      %s25 = int_to_ptr.hbm [resolvable:$true] %s24
      %s26 = sshll.u32 [#allocation3], 4
      %s27 = int_to_ptr.vmem [resolvable:$true] %s26
      %32 = dma.hbm_to_vmem [thread:$0]  %s25, 128, %s27, [#allocation4], 64, 64, 4
    $region5: #{tpu_custom_call.1} parent=1 // pred_fallthru
      _
    // Predicated region
    $region6: #{tpu_custom_call.1} parent=1 // pred_check
      _
    $region7: #{tpu_custom_call.1} parent=1 // pred_check_branch
      %34 = sbr.rel (0) target = $region9
    $region8: #{tpu_custom_call.1} parent=1 // pred_region
      %36 = vsyncadd [#allocation7], 0
      %s37 = sshll.u32 %s1, 4
      %s38 = int_to_ptr.hbm [resolvable:$true] %s37
      %s39 = sshll.u32 [#allocation6], 4
      %s40 = int_to_ptr.vmem [resolvable:$true] %s39
      %45 = dma.hbm_to_vmem [thread:$0]  %s38, 1024, %s40, [#allocation7], 64, 64, 4
    $region9: #{tpu_custom_call.1} parent=1 // pred_fallthru
      _
    // Predicated region
    $region10: #{tpu_custom_call.1} parent=1 // pred_check
      _
    $region11: #{tpu_custom_call.1} parent=1 // pred_check_branch
      %47 = sbr.rel (0) target = $region13
    $region12: #{tpu_custom_call.1} parent=1 // pred_region
      _
    $region13: #{tpu_custom_call.1} parent=1 // pred_fallthru
      _
    // Predicated region
    $region14: #{tpu_custom_call.1} parent=1 // pred_check
      _
    $region15: #{tpu_custom_call.1} parent=1 // pred_check_branch
      %49 = sbr.rel (0) target = $region17
    $region16: #{tpu_custom_call.1} parent=1 // pred_region
      _
    $region17: #{tpu_custom_call.1} parent=1 // pred_fallthru
      _
    // Predicated region
    $region18: #{tpu_custom_call.1} parent=1 // pred_check
      _
    $region19: #{tpu_custom_call.1} parent=1 // pred_check_branch
      %51 = sbr.rel (0) target = $region21
    $region20: #{tpu_custom_call.1} parent=1 // pred_region
      _
    $region21: #{tpu_custom_call.1} parent=1 // pred_fallthru
      _
    // Predicated region
    $region22: #{tpu_custom_call.1} parent=1 // pred_check
      _
    $region23: #{tpu_custom_call.1} parent=1 // pred_check_branch
      %53 = sbr.rel (0) target = $region25
    $region24: #{tpu_custom_call.1} parent=1 // pred_region
      %55 = vsyncadd [#allocation7], 0
      %s56 = sshll.u32 %s5, 4
      %s57 = int_to_ptr.hbm [resolvable:$true] %s56
      %s58 = sshll.u32 [#allocation8], 4
      %s59 = int_to_ptr.vmem [resolvable:$true] %s58
      %64 = dma.hbm_to_vmem [thread:$0]  %s57, 2048, %s59, [#allocation7], 64, 64, 4
    $region25: #{tpu_custom_call.1} parent=1 // pred_fallthru
      _
    // Predicated region
    $region26: #{tpu_custom_call.1} parent=1 // pred_check
      _
    $region27: #{tpu_custom_call.1} parent=1 // pred_check_branch
      %66 = sbr.rel (0) target = $region29
    $region28: #{tpu_custom_call.1} parent=1 // pred_region
      _
    $region29: #{tpu_custom_call.1} parent=1 // pred_fallthru
      _
    // Predicated region
    $region30: #{tpu_custom_call.1} parent=1 // pred_check
      _
    $region31: #{tpu_custom_call.1} parent=1 // pred_check_branch
      %68 = sbr.rel (0) target = $region33
    $region32: #{tpu_custom_call.1} parent=1 // pred_region
      _
    $region33: #{tpu_custom_call.1} parent=1 // pred_fallthru
      _
    // Predicated region
    $region34: #{tpu_custom_call.1} parent=1 // pred_check
      _
    $region35: #{tpu_custom_call.1} parent=1 // pred_check_branch
      %70 = sbr.rel (0) target = $region37
    $region36: #{tpu_custom_call.1} parent=1 // pred_region
      _
    $region37: #{tpu_custom_call.1} parent=1 // pred_fallthru
      _
    // Predicated region
    $region38: #{tpu_custom_call.1} parent=1 // pred_check
      _
    $region39: #{tpu_custom_call.1} parent=1 // pred_check_branch
      %72 = sbr.rel (0) target = $region41
    $region40: #{tpu_custom_call.1} parent=1 // pred_region
      %74 = vsyncadd [#allocation10], 0
      %s75 = sshll.u32 %s9, 4
      %s76 = int_to_ptr.hbm [resolvable:$true] %s75
      %s77 = sshll.u32 [#allocation9], 4
      %s78 = int_to_ptr.vmem [resolvable:$true] %s77
      %83 = dma.hbm_to_vmem [thread:$0]  %s76, 3072, %s78, [#allocation10], 64, 64, 4
    $region41: #{tpu_custom_call.1} parent=1 // pred_fallthru
      _
    // Predicated region
    $region42: #{tpu_custom_call.1} parent=1 // pred_check
      _
    $region43: #{tpu_custom_call.1} parent=1 // pred_check_branch
      %85 = sbr.rel (0) target = $region45
    $region44: #{tpu_custom_call.1} parent=1 // pred_region
      _
    $region45: #{tpu_custom_call.1} parent=1 // pred_fallthru
      _
    // Predicated region
    $region46: #{tpu_custom_call.1} parent=1 // pred_check
      _
    $region47: #{tpu_custom_call.1} parent=1 // pred_check_branch
      %87 = sbr.rel (0) target = $region49
    $region48: #{tpu_custom_call.1} parent=1 // pred_region
      %89 = dma.done [#allocation4], 128
    $region49: #{tpu_custom_call.1} parent=1 // pred_fallthru
      _
    // Predicated region
    $region50: #{tpu_custom_call.1} parent=1 // pred_check
      _
    $region51: #{tpu_custom_call.1} parent=1 // pred_check_branch
      %91 = sbr.rel (0) target = $region53
    $region52: #{tpu_custom_call.1} parent=1 // pred_region
      %93 = dma.done [#allocation7], 1024
    $region53: #{tpu_custom_call.1} parent=1 // pred_fallthru
      _
    // Predicated region
    $region54: #{tpu_custom_call.1} parent=1 // pred_check
      _
    $region55: #{tpu_custom_call.1} parent=1 // pred_check_branch
      %95 = sbr.rel (0) target = $region57
    $region56: #{tpu_custom_call.1} parent=1 // pred_region
      %97 = dma.done [#allocation7], 2048
    $region57: #{tpu_custom_call.1} parent=1 // pred_fallthru
      _
    // Predicated region
    $region58: #{tpu_custom_call.1} parent=1 // pred_check
      _
    $region59: #{tpu_custom_call.1} parent=1 // pred_check_branch
      %99 = sbr.rel (0) target = $region61
    $region60: #{tpu_custom_call.1} parent=1 // pred_region
      %101 = dma.done [#allocation10], 3072
    $region61: #{tpu_custom_call.1} parent=1 // pred_fallthru
      _
    %v102 = vlaneseq
    %v103 = vshrl.u32 %v102, 7
    %v104 = vadd.s32 %v103, 8
    %vm105 = vcmp.lt.s32.totalorder %v103, 6
    %vm106 = vcmp.lt.s32.totalorder %v104, 6
    %v107 = vsel %vm105, 1, 0
    %v108 = vsel %vm106, 1, 0
    %v109 = vcvt.s32.f32 %v107
    %v110 = vcvt.s32.f32 %v108
    %v111 = vld [vmem:[#allocation3] sm:$0xf]
    %v112 = vld [vmem:[#allocation3 + $0x4] sm:$0xf]
    %113 = vst [vmem:[#allocation2] sm:$0xf] %v111
    %114 = vst [vmem:[#allocation2 + $0xc] sm:$0xf] %v112
    %v115 = vld [vmem:[#allocation2] sm:$0xf]
    %v116 = vld [vmem:[#allocation2 + $0xc] sm:$0xf]
    %v117 = vld [vmem:[#allocation6] sm:$0xf]
    %v118 = vld [vmem:[#allocation6 + $0x4] sm:$0xf]
    %v119 = vld [vmem:[#allocation6 + $0x8] sm:$0xf]
    %v120 = vld [vmem:[#allocation6 + $0xc] sm:$0xf]
    %v121 = vld [vmem:[#allocation6 + $0x10] sm:$0xf]
    %v122 = vld [vmem:[#allocation6 + $0x14] sm:$0xf]
    %v123 = vld [vmem:[#allocation6 + $0x18] sm:$0xf]
    %v124 = vld [vmem:[#allocation6 + $0x1c] sm:$0xf]
    %v125 = vld [vmem:[#allocation6 + $0x20] sm:$0xf]
    %v126 = vld [vmem:[#allocation6 + $0x24] sm:$0xf]
    %v127 = vld [vmem:[#allocation6 + $0x28] sm:$0xf]
    %v128 = vld [vmem:[#allocation6 + $0x2c] sm:$0xf]
    %v129 = vld [vmem:[#allocation6 + $0x30] sm:$0xf]
    %v130 = vld [vmem:[#allocation6 + $0x34] sm:$0xf]
    %v131 = vld [vmem:[#allocation6 + $0x38] sm:$0xf]
    %v132 = vld [vmem:[#allocation6 + $0x3c] sm:$0xf]
    %v133 = vld [vmem:[%s2] sm:$0x1]
    %v135 = vperm.slane %v133, 0
    %v139 = vunpack.c.l.b16 %v115
    %v140 = vunpack.c.l.b16 %v116
    %v141 = vpack.c.b16 %v140, %v139
    %v159 = vunpack.c.l.b16 %v117
    %v160 = vunpack.c.l.b16 %v118
    %v161 = vunpack.c.l.b16 %v119
    %v162 = vunpack.c.l.b16 %v120
    %v163 = vunpack.c.l.b16 %v121
    %v164 = vunpack.c.l.b16 %v122
    %v165 = vunpack.c.l.b16 %v123
    %v166 = vunpack.c.l.b16 %v124
    %v167 = vunpack.c.l.b16 %v125
    %v168 = vunpack.c.l.b16 %v126
    %v169 = vunpack.c.l.b16 %v127
    %v170 = vunpack.c.l.b16 %v128
    %v171 = vunpack.c.l.b16 %v129
    %v172 = vunpack.c.l.b16 %v130
    %v173 = vunpack.c.l.b16 %v131
    %v174 = vunpack.c.l.b16 %v132
    %v175 = vpack.c.b16 %v160, %v159
    %v176 = vpack.c.b16 %v162, %v161
    %v177 = vpack.c.b16 %v164, %v163
    %v178 = vpack.c.b16 %v166, %v165
    %v179 = vpack.c.b16 %v168, %v167
    %v180 = vpack.c.b16 %v170, %v169
    %v181 = vpack.c.b16 %v172, %v171
    %v182 = vpack.c.b16 %v174, %v173
    %191 = vmatpush.bf16.msra.mxu0 %v182
    %192 = vmatpush.bf16.msra.mxu0 %v181
    %193 = vmatpush.bf16.msra.mxu0 %v180
    %194 = vmatpush.bf16.msra.mxu0 %v179
    %195 = vmatpush.bf16.msra.mxu0 %v178
    %196 = vmatpush.bf16.msra.mxu0 %v177
    %197 = vmatpush.bf16.msra.mxu0 %v176
    %198 = vmatpush.bf16.msra.mxu0 %v175
    %199 = vmatmul.bf16.gmra.mxu0 %v141
    %v200 = vpop.f32.mrf.mxu0
    %v201 = vadd.f32 %v135, %v200
    %v202 = vpop.f32.mrf.mxu0
    %v203 = vadd.f32 %v135, %v202
    %204 = vdwg.mxu0
    %v205 = vmul.f32 %v201, %v109
    %v206 = vmul.f32 %v203, %v110
    %v207 = vadd.f32 %v205, %v206
    %v208 = vrot.slane %v207, 4
    %v209 = vadd.f32 %v207, %v208
    %v210 = vrot.slane %v209, 2
    %v211 = vadd.f32 %v209, %v210
    %v212 = vrot.slane %v211, 1
    %v213 = vadd.f32 %v211, %v212
    %v214 = vmul.f32 %v213, 0.16666667
    %v215 = vmul.f32 %v205, %v201
    %v216 = vmul.f32 %v206, %v203
    %v217 = vadd.f32 %v215, %v216
    %v218 = vrot.slane %v217, 4
    %v219 = vadd.f32 %v217, %v218
    %v220 = vrot.slane %v219, 2
    %v221 = vadd.f32 %v219, %v220
    %v222 = vrot.slane %v221, 1
    %v223 = vadd.f32 %v221, %v222
    %v224 = vmul.f32 %v223, 0.16666667
    %v225 = vmul.f32 %v214, %v214
    %v226 = vsub.f32 %v224, %v225
    %v227 = vmax.f32 %v226, 0.0
    %v228 = vsub.f32 %v201, %v214
    %v229 = vsub.f32 %v203, %v214
    %v230 = vadd.f32 %v227, 1e-05
    %v231 = vrsqrt.pop %v230
    %v232 = vmul.f32 %v231, %v230
    %v233 = vmul.f32 %v232, %v231
    %v234 = vmul.f32 0.5, %v233
    %v235 = vsub.f32 1.5, %v234
    %v236 = vmul.f32 %v231, %v235
    %vm237 = vweird.f32 %v230
    %vm238 = vweird.f32 %v231
    %vm239 = vmor %vm237, %vm238
    %v240 = vsel %vm239, %v231, %v236
    %v241 = vmul.f32 %v228, %v240
    %v242 = vmul.f32 %v229, %v240
    %v243 = vld [vmem:[%s3] sm:$0x1]
    %v245 = vperm.slane %v243, 0
    %v247 = vmul.f32 %v241, %v245
    %v248 = vmul.f32 %v242, %v245
    %v249 = vld [vmem:[%s4] sm:$0x1]
    %v251 = vperm.slane %v249, 0
    %v253 = vadd.f32 %v247, %v251
    %v254 = vadd.f32 %v248, %v251
    %v255 = vmax.f32 %v253, 0.0
    %v256 = vmax.f32 %v254, 0.0
    %v257 = vpack.c.bf16 %v255, %v255
    %v258 = vpack.c.bf16 %v256, %v256
    %259 = vst [vmem:[#allocation2 + $0x4] sm:$0xf] %v257
    %260 = vst [vmem:[#allocation2 + $0x10] sm:$0xf] %v258
    %v261 = vld [vmem:[#allocation2] sm:$0xff]
    %v262 = vld [vmem:[#allocation2 + $0xc] sm:$0xff]
    %v263 = vld [vmem:[#allocation8] sm:$0xf]
    %v264 = vld [vmem:[#allocation8 + $0x4] sm:$0xf]
    %v265 = vld [vmem:[#allocation8 + $0x8] sm:$0xf]
    %v266 = vld [vmem:[#allocation8 + $0xc] sm:$0xf]
    %v267 = vld [vmem:[#allocation8 + $0x10] sm:$0xf]
    %v268 = vld [vmem:[#allocation8 + $0x14] sm:$0xf]
    %v269 = vld [vmem:[#allocation8 + $0x18] sm:$0xf]
    %v270 = vld [vmem:[#allocation8 + $0x1c] sm:$0xf]
    %v271 = vld [vmem:[#allocation8 + $0x20] sm:$0xf]
    %v272 = vld [vmem:[#allocation8 + $0x24] sm:$0xf]
    %v273 = vld [vmem:[#allocation8 + $0x28] sm:$0xf]
    %v274 = vld [vmem:[#allocation8 + $0x2c] sm:$0xf]
    %v275 = vld [vmem:[#allocation8 + $0x30] sm:$0xf]
    %v276 = vld [vmem:[#allocation8 + $0x34] sm:$0xf]
    %v277 = vld [vmem:[#allocation8 + $0x38] sm:$0xf]
    %v278 = vld [vmem:[#allocation8 + $0x3c] sm:$0xf]
    %v279 = vld [vmem:[#allocation8 + $0x40] sm:$0xf]
    %v280 = vld [vmem:[#allocation8 + $0x44] sm:$0xf]
    %v281 = vld [vmem:[#allocation8 + $0x48] sm:$0xf]
    %v282 = vld [vmem:[#allocation8 + $0x4c] sm:$0xf]
    %v283 = vld [vmem:[#allocation8 + $0x50] sm:$0xf]
    %v284 = vld [vmem:[#allocation8 + $0x54] sm:$0xf]
    %v285 = vld [vmem:[#allocation8 + $0x58] sm:$0xf]
    %v286 = vld [vmem:[#allocation8 + $0x5c] sm:$0xf]
    %v287 = vld [vmem:[#allocation8 + $0x60] sm:$0xf]
    %v288 = vld [vmem:[#allocation8 + $0x64] sm:$0xf]
    %v289 = vld [vmem:[#allocation8 + $0x68] sm:$0xf]
    %v290 = vld [vmem:[#allocation8 + $0x6c] sm:$0xf]
    %v291 = vld [vmem:[#allocation8 + $0x70] sm:$0xf]
    %v292 = vld [vmem:[#allocation8 + $0x74] sm:$0xf]
    %v293 = vld [vmem:[#allocation8 + $0x78] sm:$0xf]
    %v294 = vld [vmem:[#allocation8 + $0x7c] sm:$0xf]
    %v295 = vld [vmem:[%s6] sm:$0x1]
    %v297 = vperm.slane %v295, 0
    %v301 = vunpack.c.l.b16 %v261
    %v302 = vunpack.c.h.b16 %v261
    %v303 = vunpack.c.l.b16 %v262
    %v304 = vunpack.c.h.b16 %v262
    %v305 = vpack.c.b16 %v303, %v301
    %v306 = vpack.c.b16 %v304, %v302
    %v341 = vunpack.c.l.b16 %v263
    %v342 = vunpack.c.l.b16 %v264
    %v343 = vunpack.c.l.b16 %v265
    %v344 = vunpack.c.l.b16 %v266
    %v345 = vunpack.c.l.b16 %v267
    %v346 = vunpack.c.l.b16 %v268
    %v347 = vunpack.c.l.b16 %v269
    %v348 = vunpack.c.l.b16 %v270
    %v349 = vunpack.c.l.b16 %v271
    %v350 = vunpack.c.l.b16 %v272
    %v351 = vunpack.c.l.b16 %v273
    %v352 = vunpack.c.l.b16 %v274
    %v353 = vunpack.c.l.b16 %v275
    %v354 = vunpack.c.l.b16 %v276
    %v355 = vunpack.c.l.b16 %v277
    %v356 = vunpack.c.l.b16 %v278
    %v357 = vunpack.c.l.b16 %v279
    %v358 = vunpack.c.l.b16 %v280
    %v359 = vunpack.c.l.b16 %v281
    %v360 = vunpack.c.l.b16 %v282
    %v361 = vunpack.c.l.b16 %v283
    %v362 = vunpack.c.l.b16 %v284
    %v363 = vunpack.c.l.b16 %v285
    %v364 = vunpack.c.l.b16 %v286
    %v365 = vunpack.c.l.b16 %v287
    %v366 = vunpack.c.l.b16 %v288
    %v367 = vunpack.c.l.b16 %v289
    %v368 = vunpack.c.l.b16 %v290
    %v369 = vunpack.c.l.b16 %v291
    %v370 = vunpack.c.l.b16 %v292
    %v371 = vunpack.c.l.b16 %v293
    %v372 = vunpack.c.l.b16 %v294
    %v373 = vpack.c.b16 %v342, %v341
    %v374 = vpack.c.b16 %v344, %v343
    %v375 = vpack.c.b16 %v346, %v345
    %v376 = vpack.c.b16 %v348, %v347
    %v377 = vpack.c.b16 %v350, %v349
    %v378 = vpack.c.b16 %v352, %v351
    %v379 = vpack.c.b16 %v354, %v353
    %v380 = vpack.c.b16 %v356, %v355
    %v381 = vpack.c.b16 %v358, %v357
    %v382 = vpack.c.b16 %v360, %v359
    %v383 = vpack.c.b16 %v362, %v361
    %v384 = vpack.c.b16 %v364, %v363
    %v385 = vpack.c.b16 %v366, %v365
    %v386 = vpack.c.b16 %v368, %v367
    %v387 = vpack.c.b16 %v370, %v369
    %v388 = vpack.c.b16 %v372, %v371
    %405 = vmatpush.bf16.msra.mxu0 %v380
    %406 = vmatpush.bf16.msra.mxu0 %v379
    %407 = vmatpush.bf16.msra.mxu0 %v378
    %408 = vmatpush.bf16.msra.mxu0 %v377
    %409 = vmatpush.bf16.msra.mxu0 %v376
    %410 = vmatpush.bf16.msra.mxu0 %v375
    %411 = vmatpush.bf16.msra.mxu0 %v374
    %412 = vmatpush.bf16.msra.mxu0 %v373
    %413 = vmatmul.bf16.gmra.mxu0 %v305
    %v414 = vpop.f32.mrf.mxu0
    %v415 = vadd.f32 %v297, %v414
    %v416 = vpop.f32.mrf.mxu0
    %v417 = vadd.f32 %v297, %v416
    %418 = vdwg.mxu0
    %419 = vmatpush.bf16.msra.mxu0 %v388
    %420 = vmatpush.bf16.msra.mxu0 %v387
    %421 = vmatpush.bf16.msra.mxu0 %v386
    %422 = vmatpush.bf16.msra.mxu0 %v385
    %423 = vmatpush.bf16.msra.mxu0 %v384
    %424 = vmatpush.bf16.msra.mxu0 %v383
    %425 = vmatpush.bf16.msra.mxu0 %v382
    %426 = vmatpush.bf16.msra.mxu0 %v381
    %427 = vmatmul.bf16.gmra.mxu0 %v306
    %v428 = vpop.f32.mrf.mxu0
    %v429 = vadd.f32 %v415, %v428
    %v430 = vpop.f32.mrf.mxu0
    %v431 = vadd.f32 %v417, %v430
    %432 = vdwg.mxu0
    %v433 = vmul.f32 %v429, %v109
    %v434 = vmul.f32 %v431, %v110
    %v435 = vadd.f32 %v433, %v434
    %v436 = vrot.slane %v435, 4
    %v437 = vadd.f32 %v435, %v436
    %v438 = vrot.slane %v437, 2
    %v439 = vadd.f32 %v437, %v438
    %v440 = vrot.slane %v439, 1
    %v441 = vadd.f32 %v439, %v440
    %v442 = vmul.f32 %v441, 0.16666667
    %v443 = vmul.f32 %v433, %v429
    %v444 = vmul.f32 %v434, %v431
    %v445 = vadd.f32 %v443, %v444
    %v446 = vrot.slane %v445, 4
    %v447 = vadd.f32 %v445, %v446
    %v448 = vrot.slane %v447, 2
    %v449 = vadd.f32 %v447, %v448
    %v450 = vrot.slane %v449, 1
    %v451 = vadd.f32 %v449, %v450
    %v452 = vmul.f32 %v451, 0.16666667
    %v453 = vmul.f32 %v442, %v442
    %v454 = vsub.f32 %v452, %v453
    %v455 = vmax.f32 %v454, 0.0
    %v456 = vsub.f32 %v429, %v442
    %v457 = vsub.f32 %v431, %v442
    %v458 = vadd.f32 %v455, 1e-05
    %v459 = vrsqrt.pop %v458
    %v460 = vmul.f32 %v459, %v458
    %v461 = vmul.f32 %v460, %v459
    %v462 = vmul.f32 0.5, %v461
    %v463 = vsub.f32 1.5, %v462
    %v464 = vmul.f32 %v459, %v463
    %vm465 = vweird.f32 %v458
    %vm466 = vweird.f32 %v459
    %vm467 = vmor %vm465, %vm466
    %v468 = vsel %vm467, %v459, %v464
    %v469 = vmul.f32 %v456, %v468
    %v470 = vmul.f32 %v457, %v468
    %v471 = vld [vmem:[%s7] sm:$0x1]
    %v473 = vperm.slane %v471, 0
    %v475 = vmul.f32 %v469, %v473
    %v476 = vmul.f32 %v470, %v473
    %v477 = vld [vmem:[%s8] sm:$0x1]
    %v479 = vperm.slane %v477, 0
    %v481 = vadd.f32 %v475, %v479
    %v482 = vadd.f32 %v476, %v479
    %v483 = vmax.f32 %v481, 0.0
    %v484 = vmax.f32 %v482, 0.0
    %v485 = vpack.c.bf16 %v483, %v483
    %v486 = vpack.c.bf16 %v484, %v484
    %487 = vst [vmem:[#allocation2 + $0x8] sm:$0xf] %v485
    %488 = vst [vmem:[#allocation2 + $0x14] sm:$0xf] %v486
    %v489 = vld [vmem:[#allocation2] sm:$0xff]
    %v490 = vld [vmem:[#allocation2 + $0x8] sm:$0xf]
    %v491 = vld [vmem:[#allocation2 + $0xc] sm:$0xff]
    %v492 = vld [vmem:[#allocation2 + $0x14] sm:$0xf]
    %v493 = vld [vmem:[#allocation9] sm:$0xf]
    %v494 = vld [vmem:[#allocation9 + $0x4] sm:$0xf]
    %v495 = vld [vmem:[#allocation9 + $0x8] sm:$0xf]
    %v496 = vld [vmem:[#allocation9 + $0xc] sm:$0xf]
    %v497 = vld [vmem:[#allocation9 + $0x10] sm:$0xf]
    %v498 = vld [vmem:[#allocation9 + $0x14] sm:$0xf]
    %v499 = vld [vmem:[#allocation9 + $0x18] sm:$0xf]
    %v500 = vld [vmem:[#allocation9 + $0x1c] sm:$0xf]
    %v501 = vld [vmem:[#allocation9 + $0x20] sm:$0xf]
    %v502 = vld [vmem:[#allocation9 + $0x24] sm:$0xf]
    %v503 = vld [vmem:[#allocation9 + $0x28] sm:$0xf]
    %v504 = vld [vmem:[#allocation9 + $0x2c] sm:$0xf]
    %v505 = vld [vmem:[#allocation9 + $0x30] sm:$0xf]
    %v506 = vld [vmem:[#allocation9 + $0x34] sm:$0xf]
    %v507 = vld [vmem:[#allocation9 + $0x38] sm:$0xf]
    %v508 = vld [vmem:[#allocation9 + $0x3c] sm:$0xf]
    %v509 = vld [vmem:[#allocation9 + $0x40] sm:$0xf]
    %v510 = vld [vmem:[#allocation9 + $0x44] sm:$0xf]
    %v511 = vld [vmem:[#allocation9 + $0x48] sm:$0xf]
    %v512 = vld [vmem:[#allocation9 + $0x4c] sm:$0xf]
    %v513 = vld [vmem:[#allocation9 + $0x50] sm:$0xf]
    %v514 = vld [vmem:[#allocation9 + $0x54] sm:$0xf]
    %v515 = vld [vmem:[#allocation9 + $0x58] sm:$0xf]
    %v516 = vld [vmem:[#allocation9 + $0x5c] sm:$0xf]
    %v517 = vld [vmem:[#allocation9 + $0x60] sm:$0xf]
    %v518 = vld [vmem:[#allocation9 + $0x64] sm:$0xf]
    %v519 = vld [vmem:[#allocation9 + $0x68] sm:$0xf]
    %v520 = vld [vmem:[#allocation9 + $0x6c] sm:$0xf]
    %v521 = vld [vmem:[#allocation9 + $0x70] sm:$0xf]
    %v522 = vld [vmem:[#allocation9 + $0x74] sm:$0xf]
    %v523 = vld [vmem:[#allocation9 + $0x78] sm:$0xf]
    %v524 = vld [vmem:[#allocation9 + $0x7c] sm:$0xf]
    %v525 = vld [vmem:[#allocation9 + $0x80] sm:$0xf]
    %v526 = vld [vmem:[#allocation9 + $0x84] sm:$0xf]
    %v527 = vld [vmem:[#allocation9 + $0x88] sm:$0xf]
    %v528 = vld [vmem:[#allocation9 + $0x8c] sm:$0xf]
    %v529 = vld [vmem:[#allocation9 + $0x90] sm:$0xf]
    %v530 = vld [vmem:[#allocation9 + $0x94] sm:$0xf]
    %v531 = vld [vmem:[#allocation9 + $0x98] sm:$0xf]
    %v532 = vld [vmem:[#allocation9 + $0x9c] sm:$0xf]
    %v533 = vld [vmem:[#allocation9 + $0xa0] sm:$0xf]
    %v534 = vld [vmem:[#allocation9 + $0xa4] sm:$0xf]
    %v535 = vld [vmem:[#allocation9 + $0xa8] sm:$0xf]
    %v536 = vld [vmem:[#allocation9 + $0xac] sm:$0xf]
    %v537 = vld [vmem:[#allocation9 + $0xb0] sm:$0xf]
    %v538 = vld [vmem:[#allocation9 + $0xb4] sm:$0xf]
    %v539 = vld [vmem:[#allocation9 + $0xb8] sm:$0xf]
    %v540 = vld [vmem:[#allocation9 + $0xbc] sm:$0xf]
    %v541 = vld [vmem:[%s10] sm:$0x1]
    %v543 = vperm.slane %v541, 0
    %v549 = vunpack.c.l.b16 %v489
    %v550 = vunpack.c.h.b16 %v489
    %v551 = vunpack.c.l.b16 %v490
    %v552 = vunpack.c.l.b16 %v491
    %v553 = vunpack.c.h.b16 %v491
    %v554 = vunpack.c.l.b16 %v492
    %v555 = vpack.c.b16 %v552, %v549
    %v556 = vpack.c.b16 %v553, %v550
    %v557 = vpack.c.b16 %v554, %v551
    %v609 = vunpack.c.l.b16 %v493
    %v610 = vunpack.c.l.b16 %v494
    %v611 = vunpack.c.l.b16 %v495
    %v612 = vunpack.c.l.b16 %v496
    %v613 = vunpack.c.l.b16 %v497
    %v614 = vunpack.c.l.b16 %v498
    %v615 = vunpack.c.l.b16 %v499
    %v616 = vunpack.c.l.b16 %v500
    %v617 = vunpack.c.l.b16 %v501
    %v618 = vunpack.c.l.b16 %v502
    %v619 = vunpack.c.l.b16 %v503
    %v620 = vunpack.c.l.b16 %v504
    %v621 = vunpack.c.l.b16 %v505
    %v622 = vunpack.c.l.b16 %v506
    %v623 = vunpack.c.l.b16 %v507
    %v624 = vunpack.c.l.b16 %v508
    %v625 = vunpack.c.l.b16 %v509
    %v626 = vunpack.c.l.b16 %v510
    %v627 = vunpack.c.l.b16 %v511
    %v628 = vunpack.c.l.b16 %v512
    %v629 = vunpack.c.l.b16 %v513
    %v630 = vunpack.c.l.b16 %v514
    %v631 = vunpack.c.l.b16 %v515
    %v632 = vunpack.c.l.b16 %v516
    %v633 = vunpack.c.l.b16 %v517
    %v634 = vunpack.c.l.b16 %v518
    %v635 = vunpack.c.l.b16 %v519
    %v636 = vunpack.c.l.b16 %v520
    %v637 = vunpack.c.l.b16 %v521
    %v638 = vunpack.c.l.b16 %v522
    %v639 = vunpack.c.l.b16 %v523
    %v640 = vunpack.c.l.b16 %v524
    %v641 = vunpack.c.l.b16 %v525
    %v642 = vunpack.c.l.b16 %v526
    %v643 = vunpack.c.l.b16 %v527
    %v644 = vunpack.c.l.b16 %v528
    %v645 = vunpack.c.l.b16 %v529
    %v646 = vunpack.c.l.b16 %v530
    %v647 = vunpack.c.l.b16 %v531
    %v648 = vunpack.c.l.b16 %v532
    %v649 = vunpack.c.l.b16 %v533
    %v650 = vunpack.c.l.b16 %v534
    %v651 = vunpack.c.l.b16 %v535
    %v652 = vunpack.c.l.b16 %v536
    %v653 = vunpack.c.l.b16 %v537
    %v654 = vunpack.c.l.b16 %v538
    %v655 = vunpack.c.l.b16 %v539
    %v656 = vunpack.c.l.b16 %v540
    %v657 = vpack.c.b16 %v610, %v609
    %v658 = vpack.c.b16 %v612, %v611
    %v659 = vpack.c.b16 %v614, %v613
    %v660 = vpack.c.b16 %v616, %v615
    %v661 = vpack.c.b16 %v618, %v617
    %v662 = vpack.c.b16 %v620, %v619
    %v663 = vpack.c.b16 %v622, %v621
    %v664 = vpack.c.b16 %v624, %v623
    %v665 = vpack.c.b16 %v626, %v625
    %v666 = vpack.c.b16 %v628, %v627
    %v667 = vpack.c.b16 %v630, %v629
    %v668 = vpack.c.b16 %v632, %v631
    %v669 = vpack.c.b16 %v634, %v633
    %v670 = vpack.c.b16 %v636, %v635
    %v671 = vpack.c.b16 %v638, %v637
    %v672 = vpack.c.b16 %v640, %v639
    %v673 = vpack.c.b16 %v642, %v641
    %v674 = vpack.c.b16 %v644, %v643
    %v675 = vpack.c.b16 %v646, %v645
    %v676 = vpack.c.b16 %v648, %v647
    %v677 = vpack.c.b16 %v650, %v649
    %v678 = vpack.c.b16 %v652, %v651
    %v679 = vpack.c.b16 %v654, %v653
    %v680 = vpack.c.b16 %v656, %v655
    %705 = vmatpush.bf16.msra.mxu0 %v664
    %706 = vmatpush.bf16.msra.mxu0 %v663
    %707 = vmatpush.bf16.msra.mxu0 %v662
    %708 = vmatpush.bf16.msra.mxu0 %v661
    %709 = vmatpush.bf16.msra.mxu0 %v660
    %710 = vmatpush.bf16.msra.mxu0 %v659
    %711 = vmatpush.bf16.msra.mxu0 %v658
    %712 = vmatpush.bf16.msra.mxu0 %v657
    %713 = vmatmul.bf16.gmra.mxu0 %v555
    %v714 = vpop.f32.mrf.mxu0
    %v715 = vadd.f32 %v543, %v714
    %v716 = vpop.f32.mrf.mxu0
    %v717 = vadd.f32 %v543, %v716
    %718 = vdwg.mxu0
    %719 = vmatpush.bf16.msra.mxu0 %v672
    %720 = vmatpush.bf16.msra.mxu0 %v671
    %721 = vmatpush.bf16.msra.mxu0 %v670
    %722 = vmatpush.bf16.msra.mxu0 %v669
    %723 = vmatpush.bf16.msra.mxu0 %v668
    %724 = vmatpush.bf16.msra.mxu0 %v667
    %725 = vmatpush.bf16.msra.mxu0 %v666
    %726 = vmatpush.bf16.msra.mxu0 %v665
    %727 = vmatmul.bf16.gmra.mxu0 %v556
    %v728 = vpop.f32.mrf.mxu0
    %v729 = vadd.f32 %v715, %v728
    %v730 = vpop.f32.mrf.mxu0
    %v731 = vadd.f32 %v717, %v730
    %732 = vdwg.mxu0
    %733 = vmatpush.bf16.msra.mxu0 %v680
    %734 = vmatpush.bf16.msra.mxu0 %v679
    %735 = vmatpush.bf16.msra.mxu0 %v678
    %736 = vmatpush.bf16.msra.mxu0 %v677
    %737 = vmatpush.bf16.msra.mxu0 %v676
    %738 = vmatpush.bf16.msra.mxu0 %v675
    %739 = vmatpush.bf16.msra.mxu0 %v674
    %740 = vmatpush.bf16.msra.mxu0 %v673
    %741 = vmatmul.bf16.gmra.mxu0 %v557
    %v742 = vpop.f32.mrf.mxu0
    %v743 = vadd.f32 %v729, %v742
    %v744 = vpop.f32.mrf.mxu0
    %v745 = vadd.f32 %v731, %v744
    %746 = vdwg.mxu0
    %747 = vst [vmem:[#allocation11] sm:$0xff] %v743
    %748 = vst [vmem:[#allocation11 + $0x8] sm:$0xff] %v745
    // Predicated region
    $region62: #{tpu_custom_call.1} parent=1 // pred_check
      _
    $region63: #{tpu_custom_call.1} parent=1 // pred_check_branch
      %750 = sbr.rel (0) target = $region65
    $region64: #{tpu_custom_call.1} parent=1 // pred_region
      %752 = vsyncadd [#allocation5], 0
      %s753 = sshll.u32 [#allocation11], 4
      %s754 = int_to_ptr.vmem [resolvable:$true] %s753
      %s755 = sshll.u32 %s11, 4
      %s756 = int_to_ptr.hbm [resolvable:$true] %s755
      %761 = dma.vmem_to_hbm [thread:$0]  %s754, 256, %s756, [#allocation5], 128, 128, 8
    $region65: #{tpu_custom_call.1} parent=1 // pred_fallthru
      _
    // Predicated region
    $region66: #{tpu_custom_call.1} parent=1 // pred_check
      _
    $region67: #{tpu_custom_call.1} parent=1 // pred_check_branch
      %763 = sbr.rel (0) target = $region69
    $region68: #{tpu_custom_call.1} parent=1 // pred_region
      %765 = dma.done [#allocation5], 256
    $region69: #{tpu_custom_call.1} parent=1 // pred_fallthru
      _
    %766 = vsyncpa [#allocation4], 1
    %767 = vsyncpa [#allocation7], 1
    %768 = vsyncpa [#allocation10], 1
    %769 = vsyncpa [#allocation5], 1

</llo_original>
